<compile_context>
chip_gen: v7x
topology: tpu7x:2x2x1
jax: 0.10.0
libtpu: 0.0.40
codegen_flags: <defaults>
</compile_context>

<pallas_src>
import jax
import jax.numpy as jnp
from jax.experimental import pallas as pl
from jax.experimental.pallas import tpu as pltpu

HID1 = 128   # self.hidden_dim1
HID2 = 128   # self.hidden_dim2
OUT = 1      # self.output_dim
H2 = 2 * HID1   # both branches packed side-by-side -> 256-wide


def _qnet_kernel(x_ref, act_ref, w1_ref, wact_ref, wbig_ref, b_ref, q_ref):
    """Both Q branches in one pass, packed 256-wide.

    x_ref   : (B, S+A)  bf16   concat(state, weight)
    act_ref : (B, A)    bf16   action
    w1_ref  : (S+A, 256) bf16  [wa1 branch1 | wa1 branch2]
    wact_ref: (A, 256)   bf16  [wf1 action-half br1 | br2]
    wbig_ref: (3, 256, 256) bf16  block-diag [wa2, wa3@wf1x (fused), wf2]
    b_ref   : (8, 256)  f32    rows: [b1, b2, b3, b4, wf3 row, bf3 (lane-bcast), 0, 0]
    q_ref   : (B, 2)    f32    [q1 | q2]
    """
    f32 = jnp.float32
    bf16 = jnp.bfloat16
    b = b_ref[...]                                                  # (8, 256) f32

    # create_model layer 1 (both branches): relu(concat(state, weight) @ W1 + b1)
    h = jnp.dot(x_ref[...], w1_ref[...], preferred_element_type=f32)
    h = jnp.maximum(h + b[0:1, :], 0.0)

    # create_model layer 2 (block-diagonal 256x256)
    h = jnp.dot(h.astype(bf16), wbig_ref[0], preferred_element_type=f32) + b[1:2, :]
    h = jnp.maximum(h, 0.0)

    # create_model layer 3 fused with FNN layer 1 (offline fold wa3 @ wf1x):
    #   g = relu(h @ blockdiag(wa3@wf1x) + action @ [wf1a|wf1a] + b3)
    g = jnp.dot(h.astype(bf16), wbig_ref[1], preferred_element_type=f32)
    g = g + jnp.dot(act_ref[...], wact_ref[...], preferred_element_type=f32)
    g = jnp.maximum(g + b[2:3, :], 0.0)

    # FNN layer 2 (block-diagonal)
    g = jnp.dot(g.astype(bf16), wbig_ref[2], preferred_element_type=f32) + b[3:4, :]
    g = jnp.maximum(g, 0.0)

    # FNN output layer (128 -> 1 per branch) as lane reductions over each half.
    gw = g * b[4:5, :]                                              # g * wf3-row
    q1 = jnp.sum(gw[:, :HID1], axis=-1, keepdims=True) + b[5:6, 0:1]
    q2 = jnp.sum(gw[:, HID1:], axis=-1, keepdims=True) + b[5:6, HID1:HID1 + 1]
    q_ref[...] = jnp.concatenate([q1, q2], axis=-1)


def qnet_forward(state, weight, action, packed):
    """Qnet.forward: returns (q1, q2), each of shape (B, 1)."""
    w1, wact, wbig, bsl = packed
    B, S = state.shape
    A = weight.shape[1]

    # Pre-concatenate state & weight (cheap XLA concat) and feed bf16 activations.
    x = jnp.concatenate([state, weight], axis=1).astype(jnp.bfloat16)   # (B, S+A)
    act = action.astype(jnp.bfloat16)                                   # (B, A)

    # Advisory cost hint: 4 matmuls (256-wide) + final lane reduce.
    flops = 2 * B * ((S + A) * H2 + A * H2 + 3 * H2 * H2) + 2 * B * H2
    bytes_accessed = (2 * (x.size + act.size + w1.size + wact.size + wbig.size)
                      + 4 * bsl.size + 4 * B * 2)

    vmem = pl.BlockSpec(memory_space=pltpu.MemorySpace.VMEM)
    out = pl.pallas_call(
        _qnet_kernel,
        out_shape=jax.ShapeDtypeStruct((B, 2), jnp.float32),
        in_specs=[vmem] * 6,
        out_specs=pl.BlockSpec(memory_space=pltpu.MemorySpace.VMEM),
        cost_estimate=pl.CostEstimate(
            flops=flops, transcendentals=0, bytes_accessed=bytes_accessed),
    )(x, act, w1, wact, wbig, bsl)
    return out[:, 0:1], out[:, 1:2]


def init_branch_params(key, state_length, action_dim):
    """Raw (PyTorch-Linear-equivalent) params for one Q branch (q_i + q_i_fc)."""
    ks = jax.random.split(key, 12)

    def lin(kw, kb, fan_in, fan_out):
        bound = 1.0 / jnp.sqrt(jnp.float32(fan_in))
        w = jax.random.uniform(kw, (fan_in, fan_out), jnp.float32, -bound, bound)
        b = jax.random.uniform(kb, (1, fan_out), jnp.float32, -bound, bound)
        return w, b

    s, a = state_length, action_dim
    wa1, ba1 = lin(ks[0], ks[1], s + a, HID1)     # create_model layer 1
    wa2, ba2 = lin(ks[2], ks[3], HID1, HID2)      # create_model layer 2
    wa3, ba3 = lin(ks[4], ks[5], HID2, a)         # create_model layer 3 -> action_dim
    wf1, bf1 = lin(ks[6], ks[7], 2 * a, HID1)     # FNN layer 1
    wf2, bf2 = lin(ks[8], ks[9], HID1, HID2)      # FNN layer 2
    wf3, bf3 = lin(ks[10], ks[11], HID2, OUT)     # FNN output layer
    return (wa1, ba1, wa2, ba2, wa3, ba3, wf1, bf1, wf2, bf2, wf3, bf3)


def pack_qnet_params(p1, p2, state_length, action_dim):
    """Pack BOTH branches into 256-wide / block-diagonal bf16 slabs + f32 bias slab."""
    a = action_dim

    def prep(p):
        (wa1, ba1, wa2, ba2, wa3, ba3, wf1, bf1, wf2, bf2, wf3, bf3) = p
        wf1x, wf1a = wf1[:a], wf1[a:]
        # Offline fold of the rank-A bottleneck, kept in f32 (no nonlinearity between).
        w_fused = wa3 @ wf1x                                  # (128, 128)
        b_fused = ba3 @ wf1x + bf1                            # (1, 128)
        return wa1, ba1, wa2, ba2, w_fused, b_fused, wf1a, wf2, bf2, wf3, bf3

    (wa1_1, ba1_1, wa2_1, ba2_1, wfu_1, bfu_1, wf1a_1, wf2_1, bf2_1, wf3_1, bf3_1) = prep(p1)
    (wa1_2, ba1_2, wa2_2, ba2_2, wfu_2, bfu_2, wf1a_2, wf2_2, bf2_2, wf3_2, bf3_2) = prep(p2)

    z = jnp.zeros((HID1, HID1), jnp.float32)

    def bdiag(m1, m2):
        return jnp.block([[m1, z], [z, m2]])                  # (256, 256)

    w1 = jnp.concatenate([wa1_1, wa1_2], axis=1)              # (S+A, 256)
    wact = jnp.concatenate([wf1a_1, wf1a_2], axis=1)          # (A, 256)
    wbig = jnp.stack([bdiag(wa2_1, wa2_2),
                      bdiag(wfu_1, wfu_2),
                      bdiag(wf2_1, wf2_2)])                   # (3, 256, 256)

    w_row = jnp.concatenate([wf3_1.T, wf3_2.T], axis=1)       # (1, 256)
    # TODO(synk): the bf3 row & wf3 row packing assume OUT == 1.
    bf3_row = jnp.concatenate(
        [jnp.full((1, HID1), bf3_1[0, 0], jnp.float32),
         jnp.full((1, HID1), bf3_2[0, 0], jnp.float32)], axis=1)

    bsl = jnp.concatenate([
        jnp.concatenate([ba1_1, ba1_2], axis=1),
        jnp.concatenate([ba2_1, ba2_2], axis=1),
        jnp.concatenate([bfu_1, bfu_2], axis=1),
        jnp.concatenate([bf2_1, bf2_2], axis=1),
        w_row, bf3_row,
        jnp.zeros((2, H2), jnp.float32),                      # pad to 8 sublanes
    ], axis=0)                                                # (8, 256) f32

    return (w1.astype(jnp.bfloat16), wact.astype(jnp.bfloat16),
            wbig.astype(jnp.bfloat16), bsl)


def _branch_reference(state, weight, action, p):
    """Pure-JAX f32 reference mirroring the PyTorch module exactly (no fusion)."""
    (wa1, ba1, wa2, ba2, wa3, ba3, wf1, bf1, wf2, bf2, wf3, bf3) = p
    x = jnp.concatenate([state, weight], axis=1)
    h = jax.nn.relu(x @ wa1 + ba1)
    h = jax.nn.relu(h @ wa2 + ba2)
    feat = h @ wa3 + ba3
    x2 = jnp.concatenate([feat, action], axis=1)
    g = jax.nn.relu(x2 @ wf1 + bf1)
    g = jax.nn.relu(g @ wf2 + bf2)
    return g @ wf3 + bf3


if __name__ == "__main__":
    BATCH = 8
    STATE_LENGTH = 16
    ACTION_DIM = 4

    key = jax.random.PRNGKey(0)
    k_state, k_weight, k_action, k_p1, k_p2 = jax.random.split(key, 5)

    state = jax.random.normal(k_state, (BATCH, STATE_LENGTH), jnp.float32)
    weight = jax.random.normal(k_weight, (BATCH, ACTION_DIM), jnp.float32)
    action = jax.random.normal(k_action, (BATCH, ACTION_DIM), jnp.float32)

    params_q1 = init_branch_params(k_p1, STATE_LENGTH, ACTION_DIM)
    params_q2 = init_branch_params(k_p2, STATE_LENGTH, ACTION_DIM)
    packed = pack_qnet_params(params_q1, params_q2, STATE_LENGTH, ACTION_DIM)

    q1, q2 = jax.jit(qnet_forward)(state, weight, action, packed)
    jax.block_until_ready((q1, q2))

    # Correctness check against the exact f32 (unfused) reference.
    # Tolerance covers the ~0.2-0.4% relative rounding from bf16 weights/activations
    # (accumulation, biases and ReLU stay f32 inside the kernel).
    r1 = _branch_reference(state, weight, action, params_q1)
    r2 = _branch_reference(state, weight, action, params_q2)
    assert q1.shape == (BATCH, 1) and q2.shape == (BATCH, 1)
    assert jnp.allclose(q1, r1, atol=2e-2, rtol=2e-2), float(jnp.max(jnp.abs(q1 - r1)))
    assert jnp.allclose(q2, r2, atol=2e-2, rtol=2e-2), float(jnp.max(jnp.abs(q2 - r2)))

    print("KERNEL_OK")
</pallas_src>

<mosaic_0001>
module attributes {stable_mosaic.version = 11 : i64} {
  func.func @_qnet_kernel(%arg0: memref<8x20xbf16, #tpu.memory_space<vmem>>, %arg1: memref<8x4xbf16, #tpu.memory_space<vmem>>, %arg2: memref<20x256xbf16, #tpu.memory_space<vmem>>, %arg3: memref<4x256xbf16, #tpu.memory_space<vmem>>, %arg4: memref<3x256x256xbf16, #tpu.memory_space<vmem>>, %arg5: memref<8x256xf32, #tpu.memory_space<vmem>>, %arg6: memref<8x2xf32, #tpu.memory_space<vmem>>) attributes {dimension_semantics = [], scalar_prefetch = 0 : i64, scratch_operands = 0 : i64, tpu.core_type = #tpu.core_type<tc>} {
    %c0 = arith.constant 0 : index
    %c0_0 = arith.constant 0 : index
    %0 = vector.load %arg5[%c0, %c0_0] : memref<8x256xf32, #tpu.memory_space<vmem>>, vector<8x256xf32>
    %c0_1 = arith.constant 0 : index
    %c0_2 = arith.constant 0 : index
    %1 = vector.load %arg0[%c0_1, %c0_2] : memref<8x20xbf16, #tpu.memory_space<vmem>>, vector<8x20xbf16>
    %c0_3 = arith.constant 0 : index
    %c0_4 = arith.constant 0 : index
    %2 = vector.load %arg2[%c0_3, %c0_4] : memref<20x256xbf16, #tpu.memory_space<vmem>>, vector<20x256xbf16>
    %cst = arith.constant dense<0.000000e+00> : vector<8x256xf32>
    %3 = tpu.matmul %1, %2, %cst {dimension_numbers = #tpu.dot_dimension_numbers<[1], [0], [0], [1], [0, 0, 1, 1], [], []>} : vector<8x20xbf16>, vector<20x256xbf16>, vector<8x256xf32> -> vector<8x256xf32>
    %4 = vector.extract_strided_slice %0 {offsets = [0, 0], sizes = [1, 256], strides = [1, 1]} : vector<8x256xf32> to vector<1x256xf32>
    %5 = vector.broadcast %4 : vector<1x256xf32> to vector<8x256xf32>
    %6 = arith.addf %3, %5 : vector<8x256xf32>
    %cst_5 = arith.constant 0.000000e+00 : f32
    %7 = vector.broadcast %cst_5 : f32 to vector<8x256xf32>
    %8 = arith.maximumf %6, %7 : vector<8x256xf32>
    %9 = arith.truncf %8 : vector<8x256xf32> to vector<8x256xbf16>
    %c0_6 = arith.constant 0 : index
    %c0_7 = arith.constant 0 : index
    %c0_8 = arith.constant 0 : index
    %10 = vector.load %arg4[%c0_6, %c0_7, %c0_8] : memref<3x256x256xbf16, #tpu.memory_space<vmem>>, vector<1x256x256xbf16>
    %11 = vector.shape_cast %10 : vector<1x256x256xbf16> to vector<256x256xbf16>
    %cst_9 = arith.constant dense<0.000000e+00> : vector<8x256xf32>
    %12 = tpu.matmul %9, %11, %cst_9 {dimension_numbers = #tpu.dot_dimension_numbers<[1], [0], [0], [1], [0, 0, 1, 1], [], []>} : vector<8x256xbf16>, vector<256x256xbf16>, vector<8x256xf32> -> vector<8x256xf32>
    %13 = vector.extract_strided_slice %0 {offsets = [1, 0], sizes = [1, 256], strides = [1, 1]} : vector<8x256xf32> to vector<1x256xf32>
    %14 = vector.broadcast %13 : vector<1x256xf32> to vector<8x256xf32>
    %15 = arith.addf %12, %14 : vector<8x256xf32>
    %cst_10 = arith.constant 0.000000e+00 : f32
    %16 = vector.broadcast %cst_10 : f32 to vector<8x256xf32>
    %17 = arith.maximumf %15, %16 : vector<8x256xf32>
    %18 = arith.truncf %17 : vector<8x256xf32> to vector<8x256xbf16>
    %c1 = arith.constant 1 : index
    %c0_11 = arith.constant 0 : index
    %c0_12 = arith.constant 0 : index
    %19 = vector.load %arg4[%c1, %c0_11, %c0_12] : memref<3x256x256xbf16, #tpu.memory_space<vmem>>, vector<1x256x256xbf16>
    %20 = vector.shape_cast %19 : vector<1x256x256xbf16> to vector<256x256xbf16>
    %cst_13 = arith.constant dense<0.000000e+00> : vector<8x256xf32>
    %21 = tpu.matmul %18, %20, %cst_13 {dimension_numbers = #tpu.dot_dimension_numbers<[1], [0], [0], [1], [0, 0, 1, 1], [], []>} : vector<8x256xbf16>, vector<256x256xbf16>, vector<8x256xf32> -> vector<8x256xf32>
    %c0_14 = arith.constant 0 : index
    %c0_15 = arith.constant 0 : index
    %22 = vector.load %arg1[%c0_14, %c0_15] : memref<8x4xbf16, #tpu.memory_space<vmem>>, vector<8x4xbf16>
    %c0_16 = arith.constant 0 : index
    %c0_17 = arith.constant 0 : index
    %23 = vector.load %arg3[%c0_16, %c0_17] : memref<4x256xbf16, #tpu.memory_space<vmem>>, vector<4x256xbf16>
    %cst_18 = arith.constant dense<0.000000e+00> : vector<8x256xf32>
    %24 = tpu.matmul %22, %23, %cst_18 {dimension_numbers = #tpu.dot_dimension_numbers<[1], [0], [0], [1], [0, 0, 1, 1], [], []>} : vector<8x4xbf16>, vector<4x256xbf16>, vector<8x256xf32> -> vector<8x256xf32>
    %25 = arith.addf %21, %24 : vector<8x256xf32>
    %26 = vector.extract_strided_slice %0 {offsets = [2, 0], sizes = [1, 256], strides = [1, 1]} : vector<8x256xf32> to vector<1x256xf32>
    %27 = vector.broadcast %26 : vector<1x256xf32> to vector<8x256xf32>
    %28 = arith.addf %25, %27 : vector<8x256xf32>
    %cst_19 = arith.constant 0.000000e+00 : f32
    %29 = vector.broadcast %cst_19 : f32 to vector<8x256xf32>
    %30 = arith.maximumf %28, %29 : vector<8x256xf32>
    %31 = arith.truncf %30 : vector<8x256xf32> to vector<8x256xbf16>
    %c2 = arith.constant 2 : index
    %c0_20 = arith.constant 0 : index
    %c0_21 = arith.constant 0 : index
    %32 = vector.load %arg4[%c2, %c0_20, %c0_21] : memref<3x256x256xbf16, #tpu.memory_space<vmem>>, vector<1x256x256xbf16>
    %33 = vector.shape_cast %32 : vector<1x256x256xbf16> to vector<256x256xbf16>
    %cst_22 = arith.constant dense<0.000000e+00> : vector<8x256xf32>
    %34 = tpu.matmul %31, %33, %cst_22 {dimension_numbers = #tpu.dot_dimension_numbers<[1], [0], [0], [1], [0, 0, 1, 1], [], []>} : vector<8x256xbf16>, vector<256x256xbf16>, vector<8x256xf32> -> vector<8x256xf32>
    %35 = vector.extract_strided_slice %0 {offsets = [3, 0], sizes = [1, 256], strides = [1, 1]} : vector<8x256xf32> to vector<1x256xf32>
    %36 = vector.broadcast %35 : vector<1x256xf32> to vector<8x256xf32>
    %37 = arith.addf %34, %36 : vector<8x256xf32>
    %cst_23 = arith.constant 0.000000e+00 : f32
    %38 = vector.broadcast %cst_23 : f32 to vector<8x256xf32>
    %39 = arith.maximumf %37, %38 : vector<8x256xf32>
    %40 = vector.extract_strided_slice %0 {offsets = [4, 0], sizes = [1, 256], strides = [1, 1]} : vector<8x256xf32> to vector<1x256xf32>
    %41 = vector.broadcast %40 : vector<1x256xf32> to vector<8x256xf32>
    %42 = arith.mulf %39, %41 : vector<8x256xf32>
    %43 = vector.extract_strided_slice %42 {offsets = [0, 0], sizes = [8, 128], strides = [1, 1]} : vector<8x256xf32> to vector<8x128xf32>
    %cst_24 = arith.constant dense<0.000000e+00> : vector<8xf32>
    %44 = vector.multi_reduction <add>, %43, %cst_24 [1] : vector<8x128xf32> to vector<8xf32>
    %45 = vector.shape_cast %44 : vector<8xf32> to vector<8x1xf32>
    %46 = vector.extract_strided_slice %0 {offsets = [5, 0], sizes = [1, 1], strides = [1, 1]} : vector<8x256xf32> to vector<1x1xf32>
    %47 = vector.broadcast %46 : vector<1x1xf32> to vector<8x1xf32>
    %48 = arith.addf %45, %47 : vector<8x1xf32>
    %49 = vector.extract_strided_slice %42 {offsets = [0, 128], sizes = [8, 128], strides = [1, 1]} : vector<8x256xf32> to vector<8x128xf32>
    %cst_25 = arith.constant dense<0.000000e+00> : vector<8xf32>
    %50 = vector.multi_reduction <add>, %49, %cst_25 [1] : vector<8x128xf32> to vector<8xf32>
    %51 = vector.shape_cast %50 : vector<8xf32> to vector<8x1xf32>
    %52 = vector.extract_strided_slice %0 {offsets = [5, 128], sizes = [1, 1], strides = [1, 1]} : vector<8x256xf32> to vector<1x1xf32>
    %53 = vector.broadcast %52 : vector<1x1xf32> to vector<8x1xf32>
    %54 = arith.addf %51, %53 : vector<8x1xf32>
    %55 = tpu.concatenate %48, %54 in 1 : vector<8x1xf32>, vector<8x1xf32> -> vector<8x2xf32>
    %c0_26 = arith.constant 0 : index
    %c0_27 = arith.constant 0 : index
    %56 = vector.load %arg6[%c0_26, %c0_27] : memref<8x2xf32, #tpu.memory_space<vmem>>, vector<8x2xf32>
    tpu.vector_store %arg6[%c0_26, %c0_27], %55 {strides = array<i32>} : memref<8x2xf32, #tpu.memory_space<vmem>>, vector<8x2xf32>,
    return
  }
}

</mosaic_0001>

<llo_original>
// kernel: qnet_forward.1
$region0: #{qnet_forward.1}
  #allocation0 [shape = 'u32[]', space=smem, size = 0x4, offset = 0x4, fixed_abs, tag = 'smem constant byte address 0x4 - core index']
  #allocation1 [shape = 'u32[144,128]{1,0:T(1,128)}', space=vmem, size = 0x12000, scoped, tag = 'internal scratch']
  %s0 = inlined_call_operand.vmem [shape: bf16[8,20], index: 0, kind: input, shape index: {}]
  %s1 = inlined_call_operand.vmem [shape: bf16[8,4], index: 1, kind: input, shape index: {}]
  %s2 = inlined_call_operand.vmem [shape: bf16[20,256], index: 2, kind: input, shape index: {}]
  %s3 = inlined_call_operand.vmem [shape: bf16[4,256], index: 3, kind: input, shape index: {}]
  %s4 = inlined_call_operand.hbm [shape: bf16[3,256,256], index: 4, kind: input, shape index: {}]
  %s5 = inlined_call_operand.vmem [shape: f32[8,256], index: 5, kind: input, shape index: {}]
  %s6 = inlined_call_operand.vmem [shape: f32[8,2], index: 6, kind: output, shape index: {}]
  %s7 = sld [smem:[#allocation0]]
  $region38: #{qnet_forward.1} parent=0
    _
  %s9 = ssub.s32 1, %s7
  %s10 = scalar_select 0, %s9, %s7
  $region1: #{qnet_forward.1} parent=0
    #allocation2 [shape = 'u8[393216]{0}', space=vmem, size = 0x60000, scoped, tag = 'input window, operand 4, single buffered']
    #allocation3 [shape = 's32[1]{0}', space=sflag, size = 0x4, scoped, tag = 'scoped memory for qnet_forward.1']
    %11 = vsyncpa [#allocation3], 0
    // Predicated region
    $region2: #{qnet_forward.1} parent=1 // pred_check
      _
    $region3: #{qnet_forward.1} parent=1 // pred_check_branch
      %13 = sbr.rel (0) target = $region5
    $region4: #{qnet_forward.1} parent=1 // pred_region
      _
    $region5: #{qnet_forward.1} parent=1 // pred_fallthru
      _
    // Predicated region
    $region6: #{qnet_forward.1} parent=1 // pred_check
      _
    $region7: #{qnet_forward.1} parent=1 // pred_check_branch
      %15 = sbr.rel (0) target = $region9
    $region8: #{qnet_forward.1} parent=1 // pred_region
      _
    $region9: #{qnet_forward.1} parent=1 // pred_fallthru
      _
    // Predicated region
    $region10: #{qnet_forward.1} parent=1 // pred_check
      _
    $region11: #{qnet_forward.1} parent=1 // pred_check_branch
      %17 = sbr.rel (0) target = $region13
    $region12: #{qnet_forward.1} parent=1 // pred_region
      _
    $region13: #{qnet_forward.1} parent=1 // pred_fallthru
      _
    // Predicated region
    $region14: #{qnet_forward.1} parent=1 // pred_check
      _
    $region15: #{qnet_forward.1} parent=1 // pred_check_branch
      %19 = sbr.rel (0) target = $region17
    $region16: #{qnet_forward.1} parent=1 // pred_region
      _
    $region17: #{qnet_forward.1} parent=1 // pred_fallthru
      _
    // Predicated region
    $region18: #{qnet_forward.1} parent=1 // pred_check
      _
    $region19: #{qnet_forward.1} parent=1 // pred_check_branch
      %21 = sbr.rel (0) target = $region21
    $region20: #{qnet_forward.1} parent=1 // pred_region
      %s23 = ssub.s32 12288, 12288
      %24 = vsyncadd [#allocation3], %s23
      %s25 = sshll.u32 [#allocation2], 4
      %s26 = int_to_ptr.vmem [resolvable:$true] %s25
      %31 = dma.hbm_to_vmem [thread:$0]  %s4, 12288, %s26, [#allocation3], 128, 128, 8
    $region21: #{qnet_forward.1} parent=1 // pred_fallthru
      _
    // Predicated region
    $region22: #{qnet_forward.1} parent=1 // pred_check
      _
    $region23: #{qnet_forward.1} parent=1 // pred_check_branch
      %33 = sbr.rel (0) target = $region25
    $region24: #{qnet_forward.1} parent=1 // pred_region
      _
    $region25: #{qnet_forward.1} parent=1 // pred_fallthru
      _
    // Predicated region
    $region26: #{qnet_forward.1} parent=1 // pred_check
      _
    $region27: #{qnet_forward.1} parent=1 // pred_check_branch
      %35 = sbr.rel (0) target = $region29
    $region28: #{qnet_forward.1} parent=1 // pred_region
      %36 = dma.done [#allocation3], 12288
    $region29: #{qnet_forward.1} parent=1 // pred_fallthru
      _
    %v38 = vld [vmem:[%s5] sm:$0xff]
    %v39 = vld [vmem:[%s5 + $0x8] sm:$0xff]
    %v40 = vld [vmem:[%s0] sm:$0xf]
    %v41 = vld [vmem:[%s2] sm:$0xff]
    %v42 = vld [vmem:[%s2 + $0x8] sm:$0xff]
    %v43 = vld [vmem:[%s2 + $0x10] sm:$0x33]
    %v44 = vlaneseq
    %v45 = vshrl.u32 %v44, 7
    %v46 = vsub.s32 0, %v45
    %v47 = vrot.slane %v38, %v46
    %v48 = vlaneseq
    %v49 = vshrl.u32 %v48, 7
    %v50 = vsub.s32 0, %v49
    %v51 = vrot.slane %v39, %v50
    %v55 = vunpack.c.l.b16 %v41
    %v56 = vunpack.c.h.b16 %v41
    %v57 = vunpack.c.l.b16 %v42
    %v58 = vunpack.c.h.b16 %v42
    %v59 = vunpack.c.l.b16 %v43
    %v60 = vunpack.c.h.b16 %v43
    %v61 = vpack.c.b16 %v57, %v55
    %v62 = vpack.c.b16 %v58, %v56
    %v63 = vpack.c.b16 %v59, %v59
    %v64 = vpack.c.b16 %v60, %v60
    %vm67 = vcmask 162816
    %v69 = vsel %vm67, %v40, 0
    %vm71 = vcmask 1041408
    %v73 = vsel %vm71, %v63, 0
    %v76 = vsel %vm71, %v64, 0
    %78 = vmatprep.subr.bf16.mxu0 %v62
    %79 = vmatpush1.bf16.msra.mxu0 %v61
    %80 = vmatprep.subr.bf16.mxu0 %v76
    %81 = vmatpush1.bf16.msra.mxu0 %v73
    %82 = vmatprep.subr.bf16.mxu0 0
    %83 = vmatpush1.bf16.msra.mxu0 0
    %84 = vmatprep.subr.bf16.mxu0 0
    %85 = vmatpush1.bf16.msra.mxu0 0
    %86 = vmatprep.subr.bf16.mxu0 0
    %87 = vmatpush1.bf16.msra.mxu0 0
    %88 = vmatprep.subr.bf16.mxu0 0
    %89 = vmatpush1.bf16.msra.mxu0 0
    %90 = vmatprep.subr.bf16.mxu0 0
    %91 = vmatpush1.bf16.msra.mxu0 0
    %92 = vmatprep.subr.bf16.mxu0 0
    %93 = vmatpush1.bf16.msra.mxu0 0
    %94 = vmatprep.subr.bf16.mxu0 0
    %95 = vmatpush1.bf16.msra.mxu0 0
    %96 = vmatprep.subr.bf16.mxu0 0
    %97 = vmatpush1.bf16.msra.mxu0 0
    %98 = vmatprep.subr.bf16.mxu0 0
    %99 = vmatpush1.bf16.msra.mxu0 0
    %100 = vmatprep.subr.bf16.mxu0 0
    %101 = vmatpush1.bf16.msra.mxu0 0
    %102 = vmatprep.subr.bf16.mxu0 0
    %103 = vmatpush1.bf16.msra.mxu0 0
    %104 = vmatprep.subr.bf16.mxu0 0
    %105 = vmatpush1.bf16.msra.mxu0 0
    %106 = vmatprep.subr.bf16.mxu0 0
    %107 = vmatpush1.bf16.msra.mxu0 0
    %108 = vmatprep.subr.bf16.mxu0 0
    %109 = vmatpush1.bf16.msra.mxu0 0
    %110 = vmatprep.mubr.bf16.mxu0 0
    %111 = vmatmul.mubr.bf16.gmra.mrb[0].mxu0 %v69
    %v112 = vpop.f32.mrb[0].mxu0
    %v113 = vadd.f32 %v47, %v112
    %v114 = vpop.f32.mrb[0].mxu0
    %v115 = vadd.f32 %v51, %v114
    %v116 = vpop.f32.mrb[0].mxu0
    %v117 = vpop.f32.mrb[0].mxu0
    %118 = vdwg.mxu0
    %v119 = vmax.f32 %v113, 0.0
    %v120 = vmax.f32 %v115, 0.0
    %v121 = vpack.c.bf16 %v119, %v119
    %v122 = vpack.c.bf16 %v120, %v120
    %v123 = vld [vmem:[#allocation2] sm:$0xff]
    %v124 = vld [vmem:[#allocation2 + $0x8] sm:$0xff]
    %v125 = vld [vmem:[#allocation2 + $0x10] sm:$0xff]
    %v126 = vld [vmem:[#allocation2 + $0x18] sm:$0xff]
    %v127 = vld [vmem:[#allocation2 + $0x20] sm:$0xff]
    %v128 = vld [vmem:[#allocation2 + $0x28] sm:$0xff]
    %v129 = vld [vmem:[#allocation2 + $0x30] sm:$0xff]
    %v130 = vld [vmem:[#allocation2 + $0x38] sm:$0xff]
    %v131 = vld [vmem:[#allocation2 + $0x40] sm:$0xff]
    %v132 = vld [vmem:[#allocation2 + $0x48] sm:$0xff]
    %v133 = vld [vmem:[#allocation2 + $0x50] sm:$0xff]
    %v134 = vld [vmem:[#allocation2 + $0x58] sm:$0xff]
    %v135 = vld [vmem:[#allocation2 + $0x60] sm:$0xff]
    %v136 = vld [vmem:[#allocation2 + $0x68] sm:$0xff]
    %v137 = vld [vmem:[#allocation2 + $0x70] sm:$0xff]
    %v138 = vld [vmem:[#allocation2 + $0x78] sm:$0xff]
    %v139 = vld [vmem:[#allocation2 + $0x80] sm:$0xff]
    %v140 = vld [vmem:[#allocation2 + $0x88] sm:$0xff]
    %v141 = vld [vmem:[#allocation2 + $0x90] sm:$0xff]
    %v142 = vld [vmem:[#allocation2 + $0x98] sm:$0xff]
    %v143 = vld [vmem:[#allocation2 + $0xa0] sm:$0xff]
    %v144 = vld [vmem:[#allocation2 + $0xa8] sm:$0xff]
    %v145 = vld [vmem:[#allocation2 + $0xb0] sm:$0xff]
    %v146 = vld [vmem:[#allocation2 + $0xb8] sm:$0xff]
    %v147 = vld [vmem:[#allocation2 + $0xc0] sm:$0xff]
    %v148 = vld [vmem:[#allocation2 + $0xc8] sm:$0xff]
    %v149 = vld [vmem:[#allocation2 + $0xd0] sm:$0xff]
    %v150 = vld [vmem:[#allocation2 + $0xd8] sm:$0xff]
    %v151 = vld [vmem:[#allocation2 + $0xe0] sm:$0xff]
    %v152 = vld [vmem:[#allocation2 + $0xe8] sm:$0xff]
    %v153 = vld [vmem:[#allocation2 + $0xf0] sm:$0xff]
    %v154 = vld [vmem:[#allocation2 + $0xf8] sm:$0xff]
    %v155 = vlaneseq
    %v156 = vshrl.u32 %v155, 7
    %v157 = vsub.s32 1, %v156
    %v158 = vrot.slane %v38, %v157
    %v159 = vlaneseq
    %v160 = vshrl.u32 %v159, 7
    %v161 = vsub.s32 1, %v160
    %v162 = vrot.slane %v39, %v161
    %v195 = vunpack.c.l.b16 %v123
    %v196 = vunpack.c.h.b16 %v123
    %v197 = vunpack.c.l.b16 %v124
    %v198 = vunpack.c.h.b16 %v124
    %v199 = vunpack.c.l.b16 %v125
    %v200 = vunpack.c.h.b16 %v125
    %v201 = vunpack.c.l.b16 %v126
    %v202 = vunpack.c.h.b16 %v126
    %v203 = vunpack.c.l.b16 %v127
    %v204 = vunpack.c.h.b16 %v127
    %v205 = vunpack.c.l.b16 %v128
    %v206 = vunpack.c.h.b16 %v128
    %v207 = vunpack.c.l.b16 %v129
    %v208 = vunpack.c.h.b16 %v129
    %v209 = vunpack.c.l.b16 %v130
    %v210 = vunpack.c.h.b16 %v130
    %v211 = vunpack.c.l.b16 %v131
    %v212 = vunpack.c.h.b16 %v131
    %v213 = vunpack.c.l.b16 %v132
    %v214 = vunpack.c.h.b16 %v132
    %v215 = vunpack.c.l.b16 %v133
    %v216 = vunpack.c.h.b16 %v133
    %v217 = vunpack.c.l.b16 %v134
    %v218 = vunpack.c.h.b16 %v134
    %v219 = vunpack.c.l.b16 %v135
    %v220 = vunpack.c.h.b16 %v135
    %v221 = vunpack.c.l.b16 %v136
    %v222 = vunpack.c.h.b16 %v136
    %v223 = vunpack.c.l.b16 %v137
    %v224 = vunpack.c.h.b16 %v137
    %v225 = vunpack.c.l.b16 %v138
    %v226 = vunpack.c.h.b16 %v138
    %v227 = vunpack.c.l.b16 %v139
    %v228 = vunpack.c.h.b16 %v139
    %v229 = vunpack.c.l.b16 %v140
    %v230 = vunpack.c.h.b16 %v140
    %v231 = vunpack.c.l.b16 %v141
    %v232 = vunpack.c.h.b16 %v141
    %v233 = vunpack.c.l.b16 %v142
    %v234 = vunpack.c.h.b16 %v142
    %v235 = vunpack.c.l.b16 %v143
    %v236 = vunpack.c.h.b16 %v143
    %v237 = vunpack.c.l.b16 %v144
    %v238 = vunpack.c.h.b16 %v144
    %v239 = vunpack.c.l.b16 %v145
    %v240 = vunpack.c.h.b16 %v145
    %v241 = vunpack.c.l.b16 %v146
    %v242 = vunpack.c.h.b16 %v146
    %v243 = vunpack.c.l.b16 %v147
    %v244 = vunpack.c.h.b16 %v147
    %v245 = vunpack.c.l.b16 %v148
    %v246 = vunpack.c.h.b16 %v148
    %v247 = vunpack.c.l.b16 %v149
    %v248 = vunpack.c.h.b16 %v149
    %v249 = vunpack.c.l.b16 %v150
    %v250 = vunpack.c.h.b16 %v150
    %v251 = vunpack.c.l.b16 %v151
    %v252 = vunpack.c.h.b16 %v151
    %v253 = vunpack.c.l.b16 %v152
    %v254 = vunpack.c.h.b16 %v152
    %v255 = vunpack.c.l.b16 %v153
    %v256 = vunpack.c.h.b16 %v153
    %v257 = vunpack.c.l.b16 %v154
    %v258 = vunpack.c.h.b16 %v154
    %v259 = vpack.c.b16 %v197, %v195
    %v260 = vpack.c.b16 %v198, %v196
    %v261 = vpack.c.b16 %v201, %v199
    %v262 = vpack.c.b16 %v202, %v200
    %v263 = vpack.c.b16 %v205, %v203
    %v264 = vpack.c.b16 %v206, %v204
    %v265 = vpack.c.b16 %v209, %v207
    %v266 = vpack.c.b16 %v210, %v208
    %v267 = vpack.c.b16 %v213, %v211
    %v268 = vpack.c.b16 %v214, %v212
    %v269 = vpack.c.b16 %v217, %v215
    %v270 = vpack.c.b16 %v218, %v216
    %v271 = vpack.c.b16 %v221, %v219
    %v272 = vpack.c.b16 %v222, %v220
    %v273 = vpack.c.b16 %v225, %v223
    %v274 = vpack.c.b16 %v226, %v224
    %v275 = vpack.c.b16 %v229, %v227
    %v276 = vpack.c.b16 %v230, %v228
    %v277 = vpack.c.b16 %v233, %v231
    %v278 = vpack.c.b16 %v234, %v232
    %v279 = vpack.c.b16 %v237, %v235
    %v280 = vpack.c.b16 %v238, %v236
    %v281 = vpack.c.b16 %v241, %v239
    %v282 = vpack.c.b16 %v242, %v240
    %v283 = vpack.c.b16 %v245, %v243
    %v284 = vpack.c.b16 %v246, %v244
    %v285 = vpack.c.b16 %v249, %v247
    %v286 = vpack.c.b16 %v250, %v248
    %v287 = vpack.c.b16 %v253, %v251
    %v288 = vpack.c.b16 %v254, %v252
    %v289 = vpack.c.b16 %v257, %v255
    %v290 = vpack.c.b16 %v258, %v256
    %323 = vmatprep.subr.bf16.mxu0 %v260
    %324 = vmatpush1.bf16.msra.mxu0 %v259
    %325 = vmatprep.subr.bf16.mxu0 %v262
    %326 = vmatpush1.bf16.msra.mxu0 %v261
    %327 = vmatprep.subr.bf16.mxu0 %v264
    %328 = vmatpush1.bf16.msra.mxu0 %v263
    %329 = vmatprep.subr.bf16.mxu0 %v266
    %330 = vmatpush1.bf16.msra.mxu0 %v265
    %331 = vmatprep.subr.bf16.mxu0 %v268
    %332 = vmatpush1.bf16.msra.mxu0 %v267
    %333 = vmatprep.subr.bf16.mxu0 %v270
    %334 = vmatpush1.bf16.msra.mxu0 %v269
    %335 = vmatprep.subr.bf16.mxu0 %v272
    %336 = vmatpush1.bf16.msra.mxu0 %v271
    %337 = vmatprep.subr.bf16.mxu0 %v274
    %338 = vmatpush1.bf16.msra.mxu0 %v273
    %339 = vmatprep.subr.bf16.mxu0 %v276
    %340 = vmatpush1.bf16.msra.mxu0 %v275
    %341 = vmatprep.subr.bf16.mxu0 %v278
    %342 = vmatpush1.bf16.msra.mxu0 %v277
    %343 = vmatprep.subr.bf16.mxu0 %v280
    %344 = vmatpush1.bf16.msra.mxu0 %v279
    %345 = vmatprep.subr.bf16.mxu0 %v282
    %346 = vmatpush1.bf16.msra.mxu0 %v281
    %347 = vmatprep.subr.bf16.mxu0 %v284
    %348 = vmatpush1.bf16.msra.mxu0 %v283
    %349 = vmatprep.subr.bf16.mxu0 %v286
    %350 = vmatpush1.bf16.msra.mxu0 %v285
    %351 = vmatprep.subr.bf16.mxu0 %v288
    %352 = vmatpush1.bf16.msra.mxu0 %v287
    %353 = vmatprep.subr.bf16.mxu0 %v290
    %354 = vmatpush1.bf16.msra.mxu0 %v289
    %355 = vmatprep.mubr.bf16.mxu0 %v122
    %356 = vmatmul.mubr.bf16.gmra.mrb[0].mxu0 %v121
    %v357 = vpop.f32.mrb[0].mxu0
    %v358 = vadd.f32 %v158, %v357
    %v359 = vpop.f32.mrb[0].mxu0
    %v360 = vadd.f32 %v162, %v359
    %v361 = vpop.f32.mrb[0].mxu0
    %v362 = vpop.f32.mrb[0].mxu0
    %363 = vdwg.mxu0
    %v364 = vmax.f32 %v358, 0.0
    %v365 = vmax.f32 %v360, 0.0
    %v366 = vpack.c.bf16 %v364, %v364
    %v367 = vpack.c.bf16 %v365, %v365
    %s368 = scalar_lea.vmem [#allocation2], 256
    %v369 = vld [vmem:[%s368] sm:$0xff]
    %v370 = vld [vmem:[%s368 + $0x8] sm:$0xff]
    %v371 = vld [vmem:[%s368 + $0x10] sm:$0xff]
    %v372 = vld [vmem:[%s368 + $0x18] sm:$0xff]
    %v373 = vld [vmem:[%s368 + $0x20] sm:$0xff]
    %v374 = vld [vmem:[%s368 + $0x28] sm:$0xff]
    %v375 = vld [vmem:[%s368 + $0x30] sm:$0xff]
    %v376 = vld [vmem:[%s368 + $0x38] sm:$0xff]
    %v377 = vld [vmem:[%s368 + $0x40] sm:$0xff]
    %v378 = vld [vmem:[%s368 + $0x48] sm:$0xff]
    %v379 = vld [vmem:[%s368 + $0x50] sm:$0xff]
    %v380 = vld [vmem:[%s368 + $0x58] sm:$0xff]
    %v381 = vld [vmem:[%s368 + $0x60] sm:$0xff]
    %v382 = vld [vmem:[%s368 + $0x68] sm:$0xff]
    %v383 = vld [vmem:[%s368 + $0x70] sm:$0xff]
    %v384 = vld [vmem:[%s368 + $0x78] sm:$0xff]
    %v385 = vld [vmem:[%s368 + $0x80] sm:$0xff]
    %v386 = vld [vmem:[%s368 + $0x88] sm:$0xff]
    %v387 = vld [vmem:[%s368 + $0x90] sm:$0xff]
    %v388 = vld [vmem:[%s368 + $0x98] sm:$0xff]
    %v389 = vld [vmem:[%s368 + $0xa0] sm:$0xff]
    %v390 = vld [vmem:[%s368 + $0xa8] sm:$0xff]
    %v391 = vld [vmem:[%s368 + $0xb0] sm:$0xff]
    %v392 = vld [vmem:[%s368 + $0xb8] sm:$0xff]
    %v393 = vld [vmem:[%s368 + $0xc0] sm:$0xff]
    %v394 = vld [vmem:[%s368 + $0xc8] sm:$0xff]
    %v395 = vld [vmem:[%s368 + $0xd0] sm:$0xff]
    %v396 = vld [vmem:[%s368 + $0xd8] sm:$0xff]
    %v397 = vld [vmem:[%s368 + $0xe0] sm:$0xff]
    %v398 = vld [vmem:[%s368 + $0xe8] sm:$0xff]
    %v399 = vld [vmem:[%s368 + $0xf0] sm:$0xff]
    %v400 = vld [vmem:[%s368 + $0xf8] sm:$0xff]
    %v401 = vld [vmem:[%s1] sm:$0xf]
    %v402 = vld [vmem:[%s3] sm:$0xf]
    %v405 = vunpack.c.l.s4 1983009808
    %v406 = vunpack.c.0.s8 %v405
    %v407 = vlaneseq
    %v408 = vshrl.u32 %v407, 7
    %v409 = vsub.s32 %v406, %v408
    %v410 = vrot.slane %v402, %v409
    %v411 = vcombine.high %v410, %v410
    %vm412 = vcmask 31744
    %v414 = vsel %vm412, %v401, 0
    %v417 = vsel %vm71, %v410, 0
    %v420 = vsel %vm71, %v411, 0
    %422 = vmatprep.subr.bf16.mxu0 %v420
    %423 = vmatpush1.bf16.msra.mxu0 %v417
    %424 = vmatprep.subr.bf16.mxu0 0
    %425 = vmatpush1.bf16.msra.mxu0 0
    %426 = vmatprep.subr.bf16.mxu0 0
    %427 = vmatpush1.bf16.msra.mxu0 0
    %428 = vmatprep.subr.bf16.mxu0 0
    %429 = vmatpush1.bf16.msra.mxu0 0
    %430 = vmatprep.subr.bf16.mxu0 0
    %431 = vmatpush1.bf16.msra.mxu0 0
    %432 = vmatprep.subr.bf16.mxu0 0
    %433 = vmatpush1.bf16.msra.mxu0 0
    %434 = vmatprep.subr.bf16.mxu0 0
    %435 = vmatpush1.bf16.msra.mxu0 0
    %436 = vmatprep.subr.bf16.mxu0 0
    %437 = vmatpush1.bf16.msra.mxu0 0
    %438 = vmatprep.subr.bf16.mxu0 0
    %439 = vmatpush1.bf16.msra.mxu0 0
    %440 = vmatprep.subr.bf16.mxu0 0
    %441 = vmatpush1.bf16.msra.mxu0 0
    %442 = vmatprep.subr.bf16.mxu0 0
    %443 = vmatpush1.bf16.msra.mxu0 0
    %444 = vmatprep.subr.bf16.mxu0 0
    %445 = vmatpush1.bf16.msra.mxu0 0
    %446 = vmatprep.subr.bf16.mxu0 0
    %447 = vmatpush1.bf16.msra.mxu0 0
    %448 = vmatprep.subr.bf16.mxu0 0
    %449 = vmatpush1.bf16.msra.mxu0 0
    %450 = vmatprep.subr.bf16.mxu0 0
    %451 = vmatpush1.bf16.msra.mxu0 0
    %452 = vmatprep.subr.bf16.mxu0 0
    %453 = vmatpush1.bf16.msra.mxu0 0
    %454 = vmatprep.mubr.bf16.mxu0 0
    %455 = vmatmul.mubr.bf16.gmra.mrb[0].mxu0 %v414
    %v456 = vpop.f32.mrb[0].mxu0
    %v457 = vadd.f32 0.0, %v456
    %v458 = vpop.f32.mrb[0].mxu0
    %v459 = vadd.f32 0.0, %v458
    %v460 = vpop.f32.mrb[0].mxu0
    %v461 = vpop.f32.mrb[0].mxu0
    %462 = vdwg.mxu0
    %v495 = vunpack.c.l.b16 %v369
    %v496 = vunpack.c.h.b16 %v369
    %v497 = vunpack.c.l.b16 %v370
    %v498 = vunpack.c.h.b16 %v370
    %v499 = vunpack.c.l.b16 %v371
    %v500 = vunpack.c.h.b16 %v371
    %v501 = vunpack.c.l.b16 %v372
    %v502 = vunpack.c.h.b16 %v372
    %v503 = vunpack.c.l.b16 %v373
    %v504 = vunpack.c.h.b16 %v373
    %v505 = vunpack.c.l.b16 %v374
    %v506 = vunpack.c.h.b16 %v374
    %v507 = vunpack.c.l.b16 %v375
    %v508 = vunpack.c.h.b16 %v375
    %v509 = vunpack.c.l.b16 %v376
    %v510 = vunpack.c.h.b16 %v376
    %v511 = vunpack.c.l.b16 %v377
    %v512 = vunpack.c.h.b16 %v377
    %v513 = vunpack.c.l.b16 %v378
    %v514 = vunpack.c.h.b16 %v378
    %v515 = vunpack.c.l.b16 %v379
    %v516 = vunpack.c.h.b16 %v379
    %v517 = vunpack.c.l.b16 %v380
    %v518 = vunpack.c.h.b16 %v380
    %v519 = vunpack.c.l.b16 %v381
    %v520 = vunpack.c.h.b16 %v381
    %v521 = vunpack.c.l.b16 %v382
    %v522 = vunpack.c.h.b16 %v382
    %v523 = vunpack.c.l.b16 %v383
    %v524 = vunpack.c.h.b16 %v383
    %v525 = vunpack.c.l.b16 %v384
    %v526 = vunpack.c.h.b16 %v384
    %v527 = vunpack.c.l.b16 %v385
    %v528 = vunpack.c.h.b16 %v385
    %v529 = vunpack.c.l.b16 %v386
    %v530 = vunpack.c.h.b16 %v386
    %v531 = vunpack.c.l.b16 %v387
    %v532 = vunpack.c.h.b16 %v387
    %v533 = vunpack.c.l.b16 %v388
    %v534 = vunpack.c.h.b16 %v388
    %v535 = vunpack.c.l.b16 %v389
    %v536 = vunpack.c.h.b16 %v389
    %v537 = vunpack.c.l.b16 %v390
    %v538 = vunpack.c.h.b16 %v390
    %v539 = vunpack.c.l.b16 %v391
    %v540 = vunpack.c.h.b16 %v391
    %v541 = vunpack.c.l.b16 %v392
    %v542 = vunpack.c.h.b16 %v392
    %v543 = vunpack.c.l.b16 %v393
    %v544 = vunpack.c.h.b16 %v393
    %v545 = vunpack.c.l.b16 %v394
    %v546 = vunpack.c.h.b16 %v394
    %v547 = vunpack.c.l.b16 %v395
    %v548 = vunpack.c.h.b16 %v395
    %v549 = vunpack.c.l.b16 %v396
    %v550 = vunpack.c.h.b16 %v396
    %v551 = vunpack.c.l.b16 %v397
    %v552 = vunpack.c.h.b16 %v397
    %v553 = vunpack.c.l.b16 %v398
    %v554 = vunpack.c.h.b16 %v398
    %v555 = vunpack.c.l.b16 %v399
    %v556 = vunpack.c.h.b16 %v399
    %v557 = vunpack.c.l.b16 %v400
    %v558 = vunpack.c.h.b16 %v400
    %v559 = vpack.c.b16 %v497, %v495
    %v560 = vpack.c.b16 %v498, %v496
    %v561 = vpack.c.b16 %v501, %v499
    %v562 = vpack.c.b16 %v502, %v500
    %v563 = vpack.c.b16 %v505, %v503
    %v564 = vpack.c.b16 %v506, %v504
    %v565 = vpack.c.b16 %v509, %v507
    %v566 = vpack.c.b16 %v510, %v508
    %v567 = vpack.c.b16 %v513, %v511
    %v568 = vpack.c.b16 %v514, %v512
    %v569 = vpack.c.b16 %v517, %v515
    %v570 = vpack.c.b16 %v518, %v516
    %v571 = vpack.c.b16 %v521, %v519
    %v572 = vpack.c.b16 %v522, %v520
    %v573 = vpack.c.b16 %v525, %v523
    %v574 = vpack.c.b16 %v526, %v524
    %v575 = vpack.c.b16 %v529, %v527
    %v576 = vpack.c.b16 %v530, %v528
    %v577 = vpack.c.b16 %v533, %v531
    %v578 = vpack.c.b16 %v534, %v532
    %v579 = vpack.c.b16 %v537, %v535
    %v580 = vpack.c.b16 %v538, %v536
    %v581 = vpack.c.b16 %v541, %v539
    %v582 = vpack.c.b16 %v542, %v540
    %v583 = vpack.c.b16 %v545, %v543
    %v584 = vpack.c.b16 %v546, %v544
    %v585 = vpack.c.b16 %v549, %v547
    %v586 = vpack.c.b16 %v550, %v548
    %v587 = vpack.c.b16 %v553, %v551
    %v588 = vpack.c.b16 %v554, %v552
    %v589 = vpack.c.b16 %v557, %v555
    %v590 = vpack.c.b16 %v558, %v556
    %623 = vmatprep.subr.bf16.mxu0 %v560
    %624 = vmatpush1.bf16.msra.mxu0 %v559
    %625 = vmatprep.subr.bf16.mxu0 %v562
    %626 = vmatpush1.bf16.msra.mxu0 %v561
    %627 = vmatprep.subr.bf16.mxu0 %v564
    %628 = vmatpush1.bf16.msra.mxu0 %v563
    %629 = vmatprep.subr.bf16.mxu0 %v566
    %630 = vmatpush1.bf16.msra.mxu0 %v565
    %631 = vmatprep.subr.bf16.mxu0 %v568
    %632 = vmatpush1.bf16.msra.mxu0 %v567
    %633 = vmatprep.subr.bf16.mxu0 %v570
    %634 = vmatpush1.bf16.msra.mxu0 %v569
    %635 = vmatprep.subr.bf16.mxu0 %v572
    %636 = vmatpush1.bf16.msra.mxu0 %v571
    %637 = vmatprep.subr.bf16.mxu0 %v574
    %638 = vmatpush1.bf16.msra.mxu0 %v573
    %639 = vmatprep.subr.bf16.mxu0 %v576
    %640 = vmatpush1.bf16.msra.mxu0 %v575
    %641 = vmatprep.subr.bf16.mxu0 %v578
    %642 = vmatpush1.bf16.msra.mxu0 %v577
    %643 = vmatprep.subr.bf16.mxu0 %v580
    %644 = vmatpush1.bf16.msra.mxu0 %v579
    %645 = vmatprep.subr.bf16.mxu0 %v582
    %646 = vmatpush1.bf16.msra.mxu0 %v581
    %647 = vmatprep.subr.bf16.mxu0 %v584
    %648 = vmatpush1.bf16.msra.mxu0 %v583
    %649 = vmatprep.subr.bf16.mxu0 %v586
    %650 = vmatpush1.bf16.msra.mxu0 %v585
    %651 = vmatprep.subr.bf16.mxu0 %v588
    %652 = vmatpush1.bf16.msra.mxu0 %v587
    %653 = vmatprep.subr.bf16.mxu0 %v590
    %654 = vmatpush1.bf16.msra.mxu0 %v589
    %655 = vmatprep.mubr.bf16.mxu0 %v367
    %656 = vmatmul.mubr.bf16.gmra.mrb[0].mxu0 %v366
    %v657 = vpop.f32.mrb[0].mxu0
    %v658 = vadd.f32 %v457, %v657
    %v659 = vpop.f32.mrb[0].mxu0
    %v660 = vadd.f32 %v459, %v659
    %v661 = vpop.f32.mrb[0].mxu0
    %v662 = vpop.f32.mrb[0].mxu0
    %663 = vdwg.mxu0
    %v664 = vlaneseq
    %v665 = vshrl.u32 %v664, 7
    %v666 = vsub.s32 2, %v665
    %v667 = vrot.slane %v38, %v666
    %v668 = vlaneseq
    %v669 = vshrl.u32 %v668, 7
    %v670 = vsub.s32 2, %v669
    %v671 = vrot.slane %v39, %v670
    %v672 = vadd.f32 %v658, %v667
    %v673 = vadd.f32 %v660, %v671
    %v674 = vmax.f32 %v672, 0.0
    %v675 = vmax.f32 %v673, 0.0
    %v676 = vpack.c.bf16 %v674, %v674
    %v677 = vpack.c.bf16 %v675, %v675
    %s678 = scalar_lea.vmem [#allocation2], 512
    %v679 = vld [vmem:[%s678] sm:$0xff]
    %v680 = vld [vmem:[%s678 + $0x8] sm:$0xff]
    %v681 = vld [vmem:[%s678 + $0x10] sm:$0xff]
    %v682 = vld [vmem:[%s678 + $0x18] sm:$0xff]
    %v683 = vld [vmem:[%s678 + $0x20] sm:$0xff]
    %v684 = vld [vmem:[%s678 + $0x28] sm:$0xff]
    %v685 = vld [vmem:[%s678 + $0x30] sm:$0xff]
    %v686 = vld [vmem:[%s678 + $0x38] sm:$0xff]
    %v687 = vld [vmem:[%s678 + $0x40] sm:$0xff]
    %v688 = vld [vmem:[%s678 + $0x48] sm:$0xff]
    %v689 = vld [vmem:[%s678 + $0x50] sm:$0xff]
    %v690 = vld [vmem:[%s678 + $0x58] sm:$0xff]
    %v691 = vld [vmem:[%s678 + $0x60] sm:$0xff]
    %v692 = vld [vmem:[%s678 + $0x68] sm:$0xff]
    %v693 = vld [vmem:[%s678 + $0x70] sm:$0xff]
    %v694 = vld [vmem:[%s678 + $0x78] sm:$0xff]
    %v695 = vld [vmem:[%s678 + $0x80] sm:$0xff]
    %v696 = vld [vmem:[%s678 + $0x88] sm:$0xff]
    %v697 = vld [vmem:[%s678 + $0x90] sm:$0xff]
    %v698 = vld [vmem:[%s678 + $0x98] sm:$0xff]
    %v699 = vld [vmem:[%s678 + $0xa0] sm:$0xff]
    %v700 = vld [vmem:[%s678 + $0xa8] sm:$0xff]
    %v701 = vld [vmem:[%s678 + $0xb0] sm:$0xff]
    %v702 = vld [vmem:[%s678 + $0xb8] sm:$0xff]
    %v703 = vld [vmem:[%s678 + $0xc0] sm:$0xff]
    %v704 = vld [vmem:[%s678 + $0xc8] sm:$0xff]
    %v705 = vld [vmem:[%s678 + $0xd0] sm:$0xff]
    %v706 = vld [vmem:[%s678 + $0xd8] sm:$0xff]
    %v707 = vld [vmem:[%s678 + $0xe0] sm:$0xff]
    %v708 = vld [vmem:[%s678 + $0xe8] sm:$0xff]
    %v709 = vld [vmem:[%s678 + $0xf0] sm:$0xff]
    %v710 = vld [vmem:[%s678 + $0xf8] sm:$0xff]
    %v711 = vlaneseq
    %v712 = vshrl.u32 %v711, 7
    %v713 = vsub.s32 3, %v712
    %v714 = vrot.slane %v38, %v713
    %v715 = vlaneseq
    %v716 = vshrl.u32 %v715, 7
    %v717 = vsub.s32 3, %v716
    %v718 = vrot.slane %v39, %v717
    %v751 = vunpack.c.l.b16 %v679
    %v752 = vunpack.c.h.b16 %v679
    %v753 = vunpack.c.l.b16 %v680
    %v754 = vunpack.c.h.b16 %v680
    %v755 = vunpack.c.l.b16 %v681
    %v756 = vunpack.c.h.b16 %v681
    %v757 = vunpack.c.l.b16 %v682
    %v758 = vunpack.c.h.b16 %v682
    %v759 = vunpack.c.l.b16 %v683
    %v760 = vunpack.c.h.b16 %v683
    %v761 = vunpack.c.l.b16 %v684
    %v762 = vunpack.c.h.b16 %v684
    %v763 = vunpack.c.l.b16 %v685
    %v764 = vunpack.c.h.b16 %v685
    %v765 = vunpack.c.l.b16 %v686
    %v766 = vunpack.c.h.b16 %v686
    %v767 = vunpack.c.l.b16 %v687
    %v768 = vunpack.c.h.b16 %v687
    %v769 = vunpack.c.l.b16 %v688
    %v770 = vunpack.c.h.b16 %v688
    %v771 = vunpack.c.l.b16 %v689
    %v772 = vunpack.c.h.b16 %v689
    %v773 = vunpack.c.l.b16 %v690
    %v774 = vunpack.c.h.b16 %v690
    %v775 = vunpack.c.l.b16 %v691
    %v776 = vunpack.c.h.b16 %v691
    %v777 = vunpack.c.l.b16 %v692
    %v778 = vunpack.c.h.b16 %v692
    %v779 = vunpack.c.l.b16 %v693
    %v780 = vunpack.c.h.b16 %v693
    %v781 = vunpack.c.l.b16 %v694
    %v782 = vunpack.c.h.b16 %v694
    %v783 = vunpack.c.l.b16 %v695
    %v784 = vunpack.c.h.b16 %v695
    %v785 = vunpack.c.l.b16 %v696
    %v786 = vunpack.c.h.b16 %v696
    %v787 = vunpack.c.l.b16 %v697
    %v788 = vunpack.c.h.b16 %v697
    %v789 = vunpack.c.l.b16 %v698
    %v790 = vunpack.c.h.b16 %v698
    %v791 = vunpack.c.l.b16 %v699
    %v792 = vunpack.c.h.b16 %v699
    %v793 = vunpack.c.l.b16 %v700
    %v794 = vunpack.c.h.b16 %v700
    %v795 = vunpack.c.l.b16 %v701
    %v796 = vunpack.c.h.b16 %v701
    %v797 = vunpack.c.l.b16 %v702
    %v798 = vunpack.c.h.b16 %v702
    %v799 = vunpack.c.l.b16 %v703
    %v800 = vunpack.c.h.b16 %v703
    %v801 = vunpack.c.l.b16 %v704
    %v802 = vunpack.c.h.b16 %v704
    %v803 = vunpack.c.l.b16 %v705
    %v804 = vunpack.c.h.b16 %v705
    %v805 = vunpack.c.l.b16 %v706
    %v806 = vunpack.c.h.b16 %v706
    %v807 = vunpack.c.l.b16 %v707
    %v808 = vunpack.c.h.b16 %v707
    %v809 = vunpack.c.l.b16 %v708
    %v810 = vunpack.c.h.b16 %v708
    %v811 = vunpack.c.l.b16 %v709
    %v812 = vunpack.c.h.b16 %v709
    %v813 = vunpack.c.l.b16 %v710
    %v814 = vunpack.c.h.b16 %v710
    %v815 = vpack.c.b16 %v753, %v751
    %v816 = vpack.c.b16 %v754, %v752
    %v817 = vpack.c.b16 %v757, %v755
    %v818 = vpack.c.b16 %v758, %v756
    %v819 = vpack.c.b16 %v761, %v759
    %v820 = vpack.c.b16 %v762, %v760
    %v821 = vpack.c.b16 %v765, %v763
    %v822 = vpack.c.b16 %v766, %v764
    %v823 = vpack.c.b16 %v769, %v767
    %v824 = vpack.c.b16 %v770, %v768
    %v825 = vpack.c.b16 %v773, %v771
    %v826 = vpack.c.b16 %v774, %v772
    %v827 = vpack.c.b16 %v777, %v775
    %v828 = vpack.c.b16 %v778, %v776
    %v829 = vpack.c.b16 %v781, %v779
    %v830 = vpack.c.b16 %v782, %v780
    %v831 = vpack.c.b16 %v785, %v783
    %v832 = vpack.c.b16 %v786, %v784
    %v833 = vpack.c.b16 %v789, %v787
    %v834 = vpack.c.b16 %v790, %v788
    %v835 = vpack.c.b16 %v793, %v791
    %v836 = vpack.c.b16 %v794, %v792
    %v837 = vpack.c.b16 %v797, %v795
    %v838 = vpack.c.b16 %v798, %v796
    %v839 = vpack.c.b16 %v801, %v799
    %v840 = vpack.c.b16 %v802, %v800
    %v841 = vpack.c.b16 %v805, %v803
    %v842 = vpack.c.b16 %v806, %v804
    %v843 = vpack.c.b16 %v809, %v807
    %v844 = vpack.c.b16 %v810, %v808
    %v845 = vpack.c.b16 %v813, %v811
    %v846 = vpack.c.b16 %v814, %v812
    %879 = vmatprep.subr.bf16.mxu0 %v816
    %880 = vmatpush1.bf16.msra.mxu0 %v815
    %881 = vmatprep.subr.bf16.mxu0 %v818
    %882 = vmatpush1.bf16.msra.mxu0 %v817
    %883 = vmatprep.subr.bf16.mxu0 %v820
    %884 = vmatpush1.bf16.msra.mxu0 %v819
    %885 = vmatprep.subr.bf16.mxu0 %v822
    %886 = vmatpush1.bf16.msra.mxu0 %v821
    %887 = vmatprep.subr.bf16.mxu0 %v824
    %888 = vmatpush1.bf16.msra.mxu0 %v823
    %889 = vmatprep.subr.bf16.mxu0 %v826
    %890 = vmatpush1.bf16.msra.mxu0 %v825
    %891 = vmatprep.subr.bf16.mxu0 %v828
    %892 = vmatpush1.bf16.msra.mxu0 %v827
    %893 = vmatprep.subr.bf16.mxu0 %v830
    %894 = vmatpush1.bf16.msra.mxu0 %v829
    %895 = vmatprep.subr.bf16.mxu0 %v832
    %896 = vmatpush1.bf16.msra.mxu0 %v831
    %897 = vmatprep.subr.bf16.mxu0 %v834
    %898 = vmatpush1.bf16.msra.mxu0 %v833
    %899 = vmatprep.subr.bf16.mxu0 %v836
    %900 = vmatpush1.bf16.msra.mxu0 %v835
    %901 = vmatprep.subr.bf16.mxu0 %v838
    %902 = vmatpush1.bf16.msra.mxu0 %v837
    %903 = vmatprep.subr.bf16.mxu0 %v840
    %904 = vmatpush1.bf16.msra.mxu0 %v839
    %905 = vmatprep.subr.bf16.mxu0 %v842
    %906 = vmatpush1.bf16.msra.mxu0 %v841
    %907 = vmatprep.subr.bf16.mxu0 %v844
    %908 = vmatpush1.bf16.msra.mxu0 %v843
    %909 = vmatprep.subr.bf16.mxu0 %v846
    %910 = vmatpush1.bf16.msra.mxu0 %v845
    %911 = vmatprep.mubr.bf16.mxu0 %v677
    %912 = vmatmul.mubr.bf16.gmra.mrb[0].mxu0 %v676
    %v913 = vpop.f32.mrb[0].mxu0
    %v914 = vadd.f32 %v714, %v913
    %v915 = vpop.f32.mrb[0].mxu0
    %v916 = vadd.f32 %v718, %v915
    %v917 = vpop.f32.mrb[0].mxu0
    %v918 = vpop.f32.mrb[0].mxu0
    %919 = vdwg.mxu0
    %v920 = vmax.f32 %v914, 0.0
    %v921 = vmax.f32 %v916, 0.0
    %v922 = vlaneseq
    %v923 = vshrl.u32 %v922, 7
    %v924 = vsub.s32 4, %v923
    %v925 = vrot.slane %v38, %v924
    %v926 = vlaneseq
    %v927 = vshrl.u32 %v926, 7
    %v928 = vsub.s32 4, %v927
    %v929 = vrot.slane %v39, %v928
    %v930 = vmul.f32 %v920, %v925
    %v931 = vmul.f32 %v921, %v929
    %932 = vadd.xlane.f32.xlu0 %v930
    %v933 = vpop.xlane.xlu0 %932
    %v934 = vlaneseq
    %v935 = vshrl.u32 %v934, 7
    %v936 = vsub.s32 5, %v935
    %v937 = vrot.slane %v38, %v936
    %v938 = vadd.f32 %v933, %v937
    %939 = vadd.xlane.f32.xlu0 %v931
    %v940 = vpop.xlane.xlu0 %939
    %v941 = vlaneseq
    %v942 = vshrl.u32 %v941, 7
    %v943 = vsub.s32 5, %v942
    %v944 = vrot.slane %v39, %v943
    %v945 = vadd.f32 %v940, %v944
    %947 = vrot.lane.b32.xlu0 %v945, 1
    %v948 = vpop.permute.xlu0 %947
    %vm950 = vcmask 7168
    %v951 = vsel %vm950, %v938, %v948
    %vm952 = vcmask 15360
    %953 = vst.msk [vmem:[%s6] sm:$0xff] %vm952, %v951
    // Predicated region
    $region30: #{qnet_forward.1} parent=1 // pred_check
      _
    $region31: #{qnet_forward.1} parent=1 // pred_check_branch
      %955 = sbr.rel (0) target = $region33
    $region32: #{qnet_forward.1} parent=1 // pred_region
      _
    $region33: #{qnet_forward.1} parent=1 // pred_fallthru
      _
    // Predicated region
    $region34: #{qnet_forward.1} parent=1 // pred_check
      _
    $region35: #{qnet_forward.1} parent=1 // pred_check_branch
      %957 = sbr.rel (0) target = $region37
    $region36: #{qnet_forward.1} parent=1 // pred_region
      _
    $region37: #{qnet_forward.1} parent=1 // pred_fallthru
      _
    %958 = vsyncpa [#allocation3], 1

</llo_original>
